<compile_context>
chip_gen: v5e
topology: v5e:2x2
jax: 0.10.0
libtpu: 0.0.40
codegen_flags: <defaults>
</compile_context>

<pallas_src>
import functools
import math

import jax
import jax.numpy as jnp
from jax import lax
from jax.experimental import pallas as pl
from jax.experimental.pallas import tpu as pltpu


_VMEM_LIMIT_BYTES = 48 * 1024 * 1024   # < v7x's 64 MiB physical VMEM per core


# --------------------------------------------------------------------------
# Kernel 1: LayerNorm (over channels) + QKV 1x1-conv projections.
#   k is emitted in (C, L) layout, q / v in (L, C) layout so the flash pass
#   sees MXU-native operand layouts.
# --------------------------------------------------------------------------
def _qkv_kernel(x_ref, wk_ref, bk_ref, wq_ref, bq_ref, wv_ref, bv_ref,
                q_ref, k_ref, v_ref, *, compute_dtype):
    # x_ref: (1, C, tl)                 wk_ref: (C, C)   bk_ref: (C, 1) f32
    # wq_ref/wv_ref: (C, C) transposed  bq_ref/bv_ref: (1, C) f32
    # q_ref/v_ref: (1, tl, C)           k_ref: (1, C, tl)
    x = x_ref[0].astype(jnp.float32)                        # (C, tl)

    # LayerNorm2d: normalize over channels per spatial position (eps=1e-6, no affine).
    mean = jnp.mean(x, axis=0, keepdims=True)
    xc = x - mean
    var = jnp.mean(xc * xc, axis=0, keepdims=True)
    h = (xc * lax.rsqrt(var + 1e-6)).astype(compute_dtype)  # (C, tl)

    # k projection stays in (C, tl): native (C,C) x (C,tl) MXU product.
    k_ref[0] = (jnp.dot(wk_ref[...], h, preferred_element_type=jnp.float32)
                + bk_ref[...]).astype(k_ref.dtype)

    # q / v in (tl, C) layout: the transposed contraction over h's channel
    # (sublane) axis happens ONCE here, keeping it out of the flash inner loop.
    dn = (((0,), (0,)), ((), ()))
    q_ref[0] = (lax.dot_general(h, wq_ref[...], dn,
                                preferred_element_type=jnp.float32)
                + bq_ref[...]).astype(q_ref.dtype)           # (tl, C)
    v_ref[0] = (lax.dot_general(h, wv_ref[...], dn,
                                preferred_element_type=jnp.float32)
                + bv_ref[...]).astype(v_ref.dtype)           # (tl, C)


# --------------------------------------------------------------------------
# Kernel 2: flash attention (online softmax over key tiles) + proj_out + residual.
# --------------------------------------------------------------------------
def _flash_attn_kernel(x_ref, q_ref, k_ref, v_ref, wp_ref, bp_ref, o_ref,
                       m_sc, l_sc, acc_sc, *,
                       l_valid, l_padded, blk_k, approx_recip, compute_dtype):
    # x_ref: (1, C, tq) f32 residual     q_ref: (1, tq, C)
    # k_ref: (1, C, tk)                  v_ref: (1, tk, C)
    # wp_ref: (C, C)                     bp_ref: (C, 1) f32   o_ref: (1, C, tq)
    # m_sc/l_sc: (tq, 128) f32 lane-dense softmax stats; acc_sc: (tq, C) f32
    ki = pl.program_id(2)

    @pl.when(ki == 0)
    def _():
        m_sc[...] = jnp.full_like(m_sc, -jnp.inf)
        l_sc[...] = jnp.zeros_like(l_sc)
        acc_sc[...] = jnp.zeros_like(acc_sc)

    # scores: [tq, C] x [C, tk] -> [tq, tk], MXU-native, f32 accumulation.
    s = jnp.dot(q_ref[0], k_ref[0], preferred_element_type=jnp.float32)

    if l_padded > l_valid:  # static: mask padded key columns
        col = ki * blk_k + lax.broadcasted_iota(jnp.int32, s.shape, 1)
        s = jnp.where(col < l_valid, s, -jnp.inf)

    m_prev = m_sc[...]                                       # (tq, 128)
    m_cur = jnp.max(s, axis=-1, keepdims=True)               # (tq, 1)
    m_new = jnp.maximum(m_prev, m_cur)                       # (tq, 128)
    alpha = jnp.exp(m_prev - m_new)                          # (tq, 128)
    p = jnp.exp(s - m_new[:, 0:1])                           # (tq, tk)
    l_sc[...] = alpha * l_sc[...] + jnp.sum(p, axis=-1, keepdims=True)
    m_sc[...] = m_new

    # [tq, tk] x [tk, C] -> [tq, C]; v already in (tk, C), so MXU-native.
    pv = jnp.dot(p.astype(compute_dtype), v_ref[0],
                 preferred_element_type=jnp.float32)
    acc_sc[...] = alpha[:, 0:1] * acc_sc[...] + pv

    @pl.when(ki == pl.num_programs(2) - 1)
    def _():
        inv_l = pl.reciprocal(l_sc[...], approx=approx_recip)  # (tq, 128)
        attn = acc_sc[...] * inv_l[:, 0:1]                     # (tq, C)
        # proj_out 1x1 conv: y[o, i] = sum_c wp[o, c] * attn[i, c] -> (C, tq).
        # (one transposed-operand product per query tile, finalize only)
        y = lax.dot_general(wp_ref[...], attn.astype(compute_dtype),
                            (((1,), (1,)), ((), ())),
                            preferred_element_type=jnp.float32) + bp_ref[...]
        o_ref[0] = (x_ref[0].astype(jnp.float32) + y).astype(o_ref.dtype)


# --------------------------------------------------------------------------
# Wrapper
# --------------------------------------------------------------------------
def _round_up(x, m):
    return (x + m - 1) // m * m


def spatial_self_attention(x_nchw, params, *, compute_dtype=jnp.bfloat16,
                           block_q=512, block_k=512, block_l=1024):
    """x_nchw: (B, C, H, W) float32.  params: dict of 1x1-conv weights/biases."""
    B, C, H, W = x_nchw.shape
    L = H * W

    # Tile sizes: multiples of 128 (lane width), capped by the padded length.
    def pick(target):
        assert target % 128 == 0, "block sizes must be multiples of 128"
        return min(target, _round_up(L, 128))

    blk_q, blk_k, blk_l = pick(block_q), pick(block_k), pick(block_l)
    l_pad = _round_up(L, math.lcm(blk_q, blk_k, blk_l))

    x = x_nchw.reshape(B, C, L)                 # free reshape, no HBM transpose
    if l_pad != L:
        x = jnp.pad(x, ((0, 0), (0, 0), (0, l_pad - L)))

    scale = float(C) ** (-0.5)
    w2d = lambda w: jnp.asarray(w).reshape(C, C)
    vec = lambda b: jnp.asarray(b).reshape(-1)

    wk_m = w2d(params["wk"]).astype(compute_dtype)                          # (C, C)
    bk_c = vec(params["bk"]).reshape(C, 1).astype(jnp.float32)
    # q / v weights pre-transposed so pass 1 emits (L, C) tiles; 1/sqrt(C)
    # score scale folded into the q projection.
    wq_t = (w2d(params["wq"]).T * scale).astype(compute_dtype)              # (C, C)
    bq_r = (vec(params["bq"]) * scale).reshape(1, C).astype(jnp.float32)
    wv_t = w2d(params["wv"]).T.astype(compute_dtype)                        # (C, C)
    bv_r = vec(params["bv"]).reshape(1, C).astype(jnp.float32)
    wp = w2d(params["wp"]).astype(compute_dtype)
    bp = vec(params["bp"]).reshape(C, 1).astype(jnp.float32)

    # ---- Pass 1: LayerNorm + QKV projections (streaming over spatial tiles).
    qkv_kernel = functools.partial(_qkv_kernel, compute_dtype=compute_dtype)
    cl_spec = pl.BlockSpec((1, C, blk_l), lambda b, i: (b, 0, i))   # (B, C, L) tiles
    lc_spec = pl.BlockSpec((1, blk_l, C), lambda b, i: (b, i, 0))   # (B, L, C) tiles
    q, k, v = pl.pallas_call(
        qkv_kernel,
        out_shape=(jax.ShapeDtypeStruct((B, l_pad, C), compute_dtype),   # q (L, C)
                   jax.ShapeDtypeStruct((B, C, l_pad), compute_dtype),   # k (C, L)
                   jax.ShapeDtypeStruct((B, l_pad, C), compute_dtype)),  # v (L, C)
        grid_spec=pltpu.PrefetchScalarGridSpec(
            num_scalar_prefetch=0,
            grid=(B, l_pad // blk_l),
            in_specs=[cl_spec,
                      pl.BlockSpec((C, C), lambda b, i: (0, 0)),
                      pl.BlockSpec((C, 1), lambda b, i: (0, 0)),
                      pl.BlockSpec((C, C), lambda b, i: (0, 0)),
                      pl.BlockSpec((1, C), lambda b, i: (0, 0)),
                      pl.BlockSpec((C, C), lambda b, i: (0, 0)),
                      pl.BlockSpec((1, C), lambda b, i: (0, 0))],
            out_specs=[lc_spec, cl_spec, lc_spec]),
        compiler_params=pltpu.CompilerParams(
            dimension_semantics=("parallel", "parallel"),
            vmem_limit_bytes=_VMEM_LIMIT_BYTES),
    )(x, wk_m, bk_c, wq_t, bq_r, wv_t, bv_r)

    # ---- Pass 2: flash attention + proj_out + residual ----------------------
    attn_kernel = functools.partial(
        _flash_attn_kernel, l_valid=L, l_padded=l_pad, blk_k=blk_k,
        approx_recip=(compute_dtype != jnp.float32), compute_dtype=compute_dtype)
    xq_spec = pl.BlockSpec((1, C, blk_q), lambda b, qi, ki: (b, 0, qi))
    out = pl.pallas_call(
        attn_kernel,
        out_shape=jax.ShapeDtypeStruct((B, C, l_pad), x_nchw.dtype),
        grid_spec=pltpu.PrefetchScalarGridSpec(
            num_scalar_prefetch=0,
            grid=(B, l_pad // blk_q, l_pad // blk_k),
            in_specs=[xq_spec,                                                     # residual
                      pl.BlockSpec((1, blk_q, C), lambda b, qi, ki: (b, qi, 0)),   # q
                      pl.BlockSpec((1, C, blk_k), lambda b, qi, ki: (b, 0, ki)),   # k
                      pl.BlockSpec((1, blk_k, C), lambda b, qi, ki: (b, ki, 0)),   # v
                      pl.BlockSpec((C, C), lambda b, qi, ki: (0, 0)),              # wp
                      pl.BlockSpec((C, 1), lambda b, qi, ki: (0, 0))],             # bp
            out_specs=xq_spec,
            scratch_shapes=[pltpu.VMEM((blk_q, 128), jnp.float32),    # m (lane-dense)
                            pltpu.VMEM((blk_q, 128), jnp.float32),    # l (lane-dense)
                            pltpu.VMEM((blk_q, C), jnp.float32)]),    # acc
        compiler_params=pltpu.CompilerParams(
            dimension_semantics=("parallel", "parallel", "arbitrary"),
            vmem_limit_bytes=_VMEM_LIMIT_BYTES),
    )(x, q, k, v, wp, bp)

    if l_pad != L:
        out = out[:, :, :L]
    return out.reshape(B, C, H, W)


# --------------------------------------------------------------------------
# Pure-JAX reference replicating the torch forward (NCHW in/out).
# --------------------------------------------------------------------------
def _reference(x_nchw, params):
    B, C, H, W = x_nchw.shape
    x = x_nchw.reshape(B, C, H * W)
    mean = jnp.mean(x, axis=1, keepdims=True)
    var = jnp.mean((x - mean) ** 2, axis=1, keepdims=True)
    h = (x - mean) / jnp.sqrt(var + 1e-6)

    def conv1x1(t, w, b):
        return jnp.einsum("oc,bcl->bol", jnp.asarray(w).reshape(C, C), t) \
            + jnp.asarray(b).reshape(1, C, 1)

    q = conv1x1(h, params["wq"], params["bq"])
    k = conv1x1(h, params["wk"], params["bk"])
    v = conv1x1(h, params["wv"], params["bv"])
    w_ = jnp.einsum("bci,bcj->bij", q, k) * (float(C) ** -0.5)
    w_ = jax.nn.softmax(w_, axis=2)
    out = jnp.einsum("bij,bcj->bci", w_, v)
    out = conv1x1(out, params["wp"], params["bp"])
    return (x + out).reshape(B, C, H, W)


def _init_params(key, C):
    ks = jax.random.split(key, 8)
    scale = 1.0 / jnp.sqrt(C)
    mk = lambda k: jax.random.uniform(k, (C, C, 1, 1), jnp.float32, -scale, scale)
    mb = lambda k: jax.random.uniform(k, (C,), jnp.float32, -scale, scale)
    return {
        "wq": mk(ks[0]), "bq": mb(ks[1]),
        "wk": mk(ks[2]), "bk": mb(ks[3]),
        "wv": mk(ks[4]), "bv": mb(ks[5]),
        "wp": mk(ks[6]), "bp": mb(ks[7]),
    }


if __name__ == "__main__":
    key = jax.random.PRNGKey(0)
    kx, kp, kx2 = jax.random.split(key, 3)
    B, C, H, W = 2, 4, 16, 16
    x = jax.random.normal(kx, (B, C, H, W), jnp.float32)
    params = _init_params(kp, C)

    y_ref = _reference(x, params)

    # Strict correctness: f32 compute path, exact reciprocal.
    y_f32 = jax.block_until_ready(
        spatial_self_attention(x, params, compute_dtype=jnp.float32))
    assert y_f32.shape == (B, C, H, W)
    assert jnp.allclose(y_f32, y_ref, atol=2e-3, rtol=2e-3), "f32 mismatch vs reference"

    # Default bf16 perf path with small tiles -> grid (2, 2, 2): exercises the
    # online-softmax accumulation across multiple key tiles.
    y_bf16 = jax.block_until_ready(
        spatial_self_attention(x, params, block_q=128, block_k=128, block_l=128))
    assert y_bf16.shape == (B, C, H, W)
    assert jnp.allclose(y_bf16, y_ref, atol=5e-2, rtol=5e-2), "bf16 mismatch vs reference"

    # Non-128-multiple spatial size (L=100 -> padded to 128): exercises the
    # pad-and-mask path that replaces the old full-L fallback.
    x2 = jax.random.normal(kx2, (1, C, 10, 10), jnp.float32)
    y2_ref = _reference(x2, params)
    y2 = jax.block_until_ready(
        spatial_self_attention(x2, params, compute_dtype=jnp.float32))
    assert y2.shape == x2.shape
    assert jnp.allclose(y2, y2_ref, atol=2e-3, rtol=2e-3), "padded-L mismatch vs reference"

    print("KERNEL_OK")
</pallas_src>

<mosaic_0001>
module attributes {stable_mosaic.version = 11 : i64} {
  func.func @_qkv_kernel(%arg0: i32, %arg1: i32, %arg2: memref<1x4x256xf32, #tpu.memory_space<vmem>>, %arg3: memref<4x4xf32, #tpu.memory_space<vmem>>, %arg4: memref<4x1xf32, #tpu.memory_space<vmem>>, %arg5: memref<4x4xf32, #tpu.memory_space<vmem>>, %arg6: memref<1x4xf32, #tpu.memory_space<vmem>>, %arg7: memref<4x4xf32, #tpu.memory_space<vmem>>, %arg8: memref<1x4xf32, #tpu.memory_space<vmem>>, %arg9: memref<1x256x4xf32, #tpu.memory_space<vmem>>, %arg10: memref<1x4x256xf32, #tpu.memory_space<vmem>>, %arg11: memref<1x256x4xf32, #tpu.memory_space<vmem>>) attributes {dimension_semantics = [#tpu.dimension_semantics<parallel>, #tpu.dimension_semantics<parallel>], iteration_bounds = array<i64: 2, 1>, scalar_prefetch = 0 : i64, scratch_operands = 0 : i64, tpu.core_type = #tpu.core_type<tc>, window_params = [{transform_indices = @transform_0, window_bounds = array<i64: 1, 4, 256>}, {pipeline_mode = #tpu.pipeline_mode<synchronous>, transform_indices = @transform_1, window_bounds = array<i64: 4, 4>}, {pipeline_mode = #tpu.pipeline_mode<synchronous>, transform_indices = @transform_2, window_bounds = array<i64: 4, 1>}, {pipeline_mode = #tpu.pipeline_mode<synchronous>, transform_indices = @transform_3, window_bounds = array<i64: 4, 4>}, {pipeline_mode = #tpu.pipeline_mode<synchronous>, transform_indices = @transform_4, window_bounds = array<i64: 1, 4>}, {pipeline_mode = #tpu.pipeline_mode<synchronous>, transform_indices = @transform_5, window_bounds = array<i64: 4, 4>}, {pipeline_mode = #tpu.pipeline_mode<synchronous>, transform_indices = @transform_6, window_bounds = array<i64: 1, 4>}, {transform_indices = @transform_7, window_bounds = array<i64: 1, 256, 4>}, {transform_indices = @transform_8, window_bounds = array<i64: 1, 4, 256>}, {transform_indices = @transform_9, window_bounds = array<i64: 1, 256, 4>}]} {
    %c0 = arith.constant 0 : index
    %c0_0 = arith.constant 0 : index
    %c0_1 = arith.constant 0 : index
    %0 = vector.load %arg2[%c0, %c0_0, %c0_1] : memref<1x4x256xf32, #tpu.memory_space<vmem>>, vector<1x4x256xf32>
    %1 = vector.shape_cast %0 : vector<1x4x256xf32> to vector<4x256xf32>
    %cst = arith.constant dense<0.000000e+00> : vector<256xf32>
    %2 = vector.multi_reduction <add>, %1, %cst [0] : vector<4x256xf32> to vector<256xf32>
    %3 = vector.shape_cast %2 : vector<256xf32> to vector<1x256xf32>
    %cst_2 = arith.constant 4.000000e+00 : f32
    %4 = vector.broadcast %cst_2 : f32 to vector<1x256xf32>
    %5 = arith.divf %3, %4 : vector<1x256xf32>
    %6 = vector.broadcast %5 : vector<1x256xf32> to vector<4x256xf32>
    %7 = arith.subf %1, %6 : vector<4x256xf32>
    %8 = arith.mulf %7, %7 : vector<4x256xf32>
    %cst_3 = arith.constant dense<0.000000e+00> : vector<256xf32>
    %9 = vector.multi_reduction <add>, %8, %cst_3 [0] : vector<4x256xf32> to vector<256xf32>
    %10 = vector.shape_cast %9 : vector<256xf32> to vector<1x256xf32>
    %cst_4 = arith.constant 4.000000e+00 : f32
    %11 = vector.broadcast %cst_4 : f32 to vector<1x256xf32>
    %12 = arith.divf %10, %11 : vector<1x256xf32>
    %cst_5 = arith.constant 9.99999997E-7 : f32
    %13 = vector.broadcast %cst_5 : f32 to vector<1x256xf32>
    %14 = arith.addf %12, %13 : vector<1x256xf32>
    %15 = math.rsqrt %14 : vector<1x256xf32>
    %16 = vector.broadcast %15 : vector<1x256xf32> to vector<4x256xf32>
    %17 = arith.mulf %7, %16 : vector<4x256xf32>
    %c0_6 = arith.constant 0 : index
    %c0_7 = arith.constant 0 : index
    %18 = vector.load %arg3[%c0_6, %c0_7] : memref<4x4xf32, #tpu.memory_space<vmem>>, vector<4x4xf32>
    %cst_8 = arith.constant dense<0.000000e+00> : vector<4x256xf32>
    %19 = tpu.matmul %18, %17, %cst_8 {dimension_numbers = #tpu.dot_dimension_numbers<[1], [0], [0], [1], [0, 0, 1, 1], [], []>} : vector<4x4xf32>, vector<4x256xf32>, vector<4x256xf32> -> vector<4x256xf32>
    %c0_9 = arith.constant 0 : index
    %c0_10 = arith.constant 0 : index
    %20 = vector.load %arg4[%c0_9, %c0_10] : memref<4x1xf32, #tpu.memory_space<vmem>>, vector<4x1xf32>
    %21 = vector.broadcast %20 : vector<4x1xf32> to vector<4x256xf32>
    %22 = arith.addf %19, %21 : vector<4x256xf32>
    %c0_11 = arith.constant 0 : index
    %c0_12 = arith.constant 0 : index
    %c0_13 = arith.constant 0 : index
    %23 = vector.load %arg10[%c0_11, %c0_12, %c0_13] : memref<1x4x256xf32, #tpu.memory_space<vmem>>, vector<1x4x256xf32>
    %24 = vector.shape_cast %23 : vector<1x4x256xf32> to vector<4x256xf32>
    %25 = vector.shape_cast %22 : vector<4x256xf32> to vector<1x4x256xf32>
    tpu.vector_store %arg10[%c0_11, %c0_12, %c0_13], %25 {strides = array<i32>} : memref<1x4x256xf32, #tpu.memory_space<vmem>>, vector<1x4x256xf32>,
    %c0_14 = arith.constant 0 : index
    %c0_15 = arith.constant 0 : index
    %26 = vector.load %arg5[%c0_14, %c0_15] : memref<4x4xf32, #tpu.memory_space<vmem>>, vector<4x4xf32>
    %cst_16 = arith.constant dense<0.000000e+00> : vector<256x4xf32>
    %27 = tpu.matmul %17, %26, %cst_16 {dimension_numbers = #tpu.dot_dimension_numbers<[0], [0], [1], [1], [0, 1, 1, 1], [], []>} : vector<4x256xf32>, vector<4x4xf32>, vector<256x4xf32> -> vector<256x4xf32>
    %c0_17 = arith.constant 0 : index
    %c0_18 = arith.constant 0 : index
    %28 = vector.load %arg6[%c0_17, %c0_18] : memref<1x4xf32, #tpu.memory_space<vmem>>, vector<1x4xf32>
    %29 = vector.broadcast %28 : vector<1x4xf32> to vector<256x4xf32>
    %30 = arith.addf %27, %29 : vector<256x4xf32>
    %c0_19 = arith.constant 0 : index
    %c0_20 = arith.constant 0 : index
    %c0_21 = arith.constant 0 : index
    %31 = vector.load %arg9[%c0_19, %c0_20, %c0_21] : memref<1x256x4xf32, #tpu.memory_space<vmem>>, vector<1x256x4xf32>
    %32 = vector.shape_cast %31 : vector<1x256x4xf32> to vector<256x4xf32>
    %33 = vector.shape_cast %30 : vector<256x4xf32> to vector<1x256x4xf32>
    tpu.vector_store %arg9[%c0_19, %c0_20, %c0_21], %33 {strides = array<i32>} : memref<1x256x4xf32, #tpu.memory_space<vmem>>, vector<1x256x4xf32>,
    %c0_22 = arith.constant 0 : index
    %c0_23 = arith.constant 0 : index
    %34 = vector.load %arg7[%c0_22, %c0_23] : memref<4x4xf32, #tpu.memory_space<vmem>>, vector<4x4xf32>
    %cst_24 = arith.constant dense<0.000000e+00> : vector<256x4xf32>
    %35 = tpu.matmul %17, %34, %cst_24 {dimension_numbers = #tpu.dot_dimension_numbers<[0], [0], [1], [1], [0, 1, 1, 1], [], []>} : vector<4x256xf32>, vector<4x4xf32>, vector<256x4xf32> -> vector<256x4xf32>
    %c0_25 = arith.constant 0 : index
    %c0_26 = arith.constant 0 : index
    %36 = vector.load %arg8[%c0_25, %c0_26] : memref<1x4xf32, #tpu.memory_space<vmem>>, vector<1x4xf32>
    %37 = vector.broadcast %36 : vector<1x4xf32> to vector<256x4xf32>
    %38 = arith.addf %35, %37 : vector<256x4xf32>
    %c0_27 = arith.constant 0 : index
    %c0_28 = arith.constant 0 : index
    %c0_29 = arith.constant 0 : index
    %39 = vector.load %arg11[%c0_27, %c0_28, %c0_29] : memref<1x256x4xf32, #tpu.memory_space<vmem>>, vector<1x256x4xf32>
    %40 = vector.shape_cast %39 : vector<1x256x4xf32> to vector<256x4xf32>
    %41 = vector.shape_cast %38 : vector<256x4xf32> to vector<1x256x4xf32>
    tpu.vector_store %arg11[%c0_27, %c0_28, %c0_29], %41 {strides = array<i32>} : memref<1x256x4xf32, #tpu.memory_space<vmem>>, vector<1x256x4xf32>,
    return
  }
  func.func @transform_0(%arg0: i32, %arg1: i32) -> (i32, i32, i32) {
    %c0_i32 = arith.constant 0 : i32
    %c0_i32_0 = arith.constant 0 : i32
    return %arg0, %c0_i32, %arg1 : i32, i32, i32
  }
  func.func @transform_1(%arg0: i32, %arg1: i32) -> (i32, i32) {
    %c0_i32 = arith.constant 0 : i32
    %c0_i32_0 = arith.constant 0 : i32
    %c0_i32_1 = arith.constant 0 : i32
    return %c0_i32, %c0_i32_0 : i32, i32
  }
  func.func @transform_2(%arg0: i32, %arg1: i32) -> (i32, i32) {
    %c0_i32 = arith.constant 0 : i32
    %c0_i32_0 = arith.constant 0 : i32
    %c0_i32_1 = arith.constant 0 : i32
    return %c0_i32, %c0_i32_0 : i32, i32
  }
  func.func @transform_3(%arg0: i32, %arg1: i32) -> (i32, i32) {
    %c0_i32 = arith.constant 0 : i32
    %c0_i32_0 = arith.constant 0 : i32
    %c0_i32_1 = arith.constant 0 : i32
    return %c0_i32, %c0_i32_0 : i32, i32
  }
  func.func @transform_4(%arg0: i32, %arg1: i32) -> (i32, i32) {
    %c0_i32 = arith.constant 0 : i32
    %c0_i32_0 = arith.constant 0 : i32
    %c0_i32_1 = arith.constant 0 : i32
    return %c0_i32, %c0_i32_0 : i32, i32
  }
  func.func @transform_5(%arg0: i32, %arg1: i32) -> (i32, i32) {
    %c0_i32 = arith.constant 0 : i32
    %c0_i32_0 = arith.constant 0 : i32
    %c0_i32_1 = arith.constant 0 : i32
    return %c0_i32, %c0_i32_0 : i32, i32
  }
  func.func @transform_6(%arg0: i32, %arg1: i32) -> (i32, i32) {
    %c0_i32 = arith.constant 0 : i32
    %c0_i32_0 = arith.constant 0 : i32
    %c0_i32_1 = arith.constant 0 : i32
    return %c0_i32, %c0_i32_0 : i32, i32
  }
  func.func @transform_7(%arg0: i32, %arg1: i32) -> (i32, i32, i32) {
    %c0_i32 = arith.constant 0 : i32
    %c0_i32_0 = arith.constant 0 : i32
    return %arg0, %arg1, %c0_i32 : i32, i32, i32
  }
  func.func @transform_8(%arg0: i32, %arg1: i32) -> (i32, i32, i32) {
    %c0_i32 = arith.constant 0 : i32
    %c0_i32_0 = arith.constant 0 : i32
    return %arg0, %c0_i32, %arg1 : i32, i32, i32
  }
  func.func @transform_9(%arg0: i32, %arg1: i32) -> (i32, i32, i32) {
    %c0_i32 = arith.constant 0 : i32
    %c0_i32_0 = arith.constant 0 : i32
    return %arg0, %arg1, %c0_i32 : i32, i32, i32
  }
}

</mosaic_0001>

<llo_original>
// kernel: tpu_custom_call.1
$region0: #{tpu_custom_call.1}
  #allocation0 [shape = 'u32[]', space=smem, size = 0x4, offset = 0x4, fixed_abs, tag = 'smem constant byte address 0x4 - core index']
  #allocation1 [shape = 'u32[72,128]{1,0:T(1,128)}', space=vmem, size = 0x9000, scoped, tag = 'internal scratch']
  %s0 = inlined_call_operand.hbm [shape: f32[2,4,256], index: 0, kind: input, shape index: {}]
  %s1 = inlined_call_operand.vmem [shape: f32[4,4], index: 1, kind: input, shape index: {}]
  %s2 = inlined_call_operand.vmem [shape: f32[4,1], index: 2, kind: input, shape index: {}]
  %s3 = inlined_call_operand.hbm [shape: f32[4,4], index: 3, kind: input, shape index: {}]
  %s4 = inlined_call_operand.vmem [shape: f32[1,4], index: 4, kind: input, shape index: {}]
  %s5 = inlined_call_operand.hbm [shape: f32[4,4], index: 5, kind: input, shape index: {}]
  %s6 = inlined_call_operand.vmem [shape: f32[1,4], index: 6, kind: input, shape index: {}]
  %s7 = inlined_call_operand.vmem [shape: f32[2,256,4], index: 7, kind: output, shape index: {0}]
  %s8 = inlined_call_operand.hbm [shape: f32[2,4,256], index: 8, kind: output, shape index: {1}]
  %s9 = inlined_call_operand.vmem [shape: f32[2,256,4], index: 9, kind: output, shape index: {2}]
  %10 = xla_tuple %s7, %s8, %s9
  %s11 = sld [smem:[#allocation0]]
  $region89: #{tpu_custom_call.1} parent=0
    _
  %s13 = ssub.s32 1, %s11
  %s14 = scalar_select 0, %s13, %s11
  $region1: #{tpu_custom_call.1} parent=0
    #allocation2 [shape = 'u8[8192]{0}', space=vmem, size = 0x2000, scoped, tag = 'input window, operand 0']
    #allocation3 [shape = 's32[2]{0}', space=sflag, size = 0x8, scoped, tag = 'scoped memory for tpu_custom_call.1']
    #allocation4 [shape = 's32[2]{0}', space=sflag, size = 0x8, scoped, tag = 'scoped memory for tpu_custom_call.1']
    #allocation5 [shape = 'u8[2048]{0}', space=vmem, size = 0x800, scoped, tag = 'input window, operand 3, single buffered']
    #allocation6 [shape = 's32[1]{0}', space=sflag, size = 0x4, scoped, tag = 'scoped memory for tpu_custom_call.1']
    #allocation7 [shape = 'u8[2048]{0}', space=vmem, size = 0x800, scoped, tag = 'input window, operand 5, single buffered']
    #allocation8 [shape = 'u8[8192]{0}', space=vmem, size = 0x2000, scoped, tag = 'output window, operand 1']
    %15 = vsyncpa [#allocation3], 0
    %s16 = scalar_lea.sflag [#allocation3], 1
    %17 = vsyncpa %s16, 0
    %18 = vsyncpa [#allocation6], 0
    %19 = vsyncpa [#allocation4], 0
    %s20 = scalar_lea.sflag [#allocation4], 1
    %21 = vsyncpa %s20, 0
    loop: start=0, step=1, limit=4
    $region2: #{tpu_custom_call.1} parent=1 // loop_pre_header
      _
    $region3: #{tpu_custom_call.1} parent=1 // loop_header
      %s23 = sphi 0, %s27
      %p24 = scmp.ge.s32.totalorder %s23, 4
      %s30 = sphi 0, %s42
      %s31 = sphi 0, %s38
      %s32 = sphi 0, %s30
      %s33 = sphi 0, %s31
      %s34 = sphi 0, %s32
      %s35 = sphi 0, %s33
      %s47 = sphi 0, %s49
      %s50 = sphi 0, %s47
      %s51 = sphi 0, %s50
      %s67 = sphi 0, %s51
      %s71 = sphi 0, %s71
      %s73 = sphi 0, %s71
      %s74 = sphi 0, %s73
      %s88 = sphi 0, %s74
      %s92 = sphi 0, %s92
      %s94 = sphi 0, %s92
      %s95 = sphi 0, %s94
      %s109 = sphi 0, %s95
      %s113 = sphi 0, %s113
      %s115 = sphi 0, %s113
      %s116 = sphi 0, %s115
      %s130 = sphi 0, %s116
      %s134 = sphi 0, %s134
      %s136 = sphi 0, %s134
      %s137 = sphi 0, %s136
      %s151 = sphi 0, %s137
      %s155 = sphi 0, %s155
      %s157 = sphi 0, %s155
      %s158 = sphi 0, %s157
      %s172 = sphi 0, %s158
      %s176 = sphi 0, %s176
      %s178 = sphi 0, %s176
      %s179 = sphi 0, %s178
      %s193 = sphi 0, %s179
      %s201 = sphi 0, %s203
      %s204 = sphi 0, %s201
      %s205 = sphi 0, %s204
      %s221 = sphi 0, %s205
      %s229 = sphi 0, %s231
      %s232 = sphi 0, %s229
      %s233 = sphi 0, %s232
      %s249 = sphi 0, %s233
      %s257 = sphi 0, %s259
      %s260 = sphi 0, %s257
      %s261 = sphi 0, %s260
      %s277 = sphi 0, %s261
    $region4: #{tpu_custom_call.1} parent=1 // loop_header_branch
      %26 = sbr.rel (%p24) target = $region8
    $region5: #{tpu_custom_call.1} parent=1 // loop_body
      %s28 = ssub.s32 %s23, 1
      %s29 = ssub.s32 %s23, 2
      %s36 = sadd.s32 1, %s31
      %p37 = scmp.ge.s32.totalorder %s36, 1
      %s38 = scalar_select %p37, 0, %s36
      %s39 = sadd.s32 1, %s30
      %s40 = scalar_select %p37, %s39, %s30
      %p41 = scmp.ge.s32.totalorder %s40, 2
      %s42 = scalar_select %p41, 0, %s40
      %s43 = ssub.s32 %s30, %s42
      %s44 = ssub.s32 %s31, %s38
      %s45 = sor.u32 %s43, %s44
      %p46 = scmp.eq.s32.totalorder %s45, 0
      %s48 = sadd.s32 %s47, 1
      %s49 = scalar_select %p46, %s47, %s48
      %p52 = pneg %p46
      %p53 = scmp.eq.s32.totalorder %s23, 1
      %p54 = por %p52, %p53
      %p55 = scmp.ne.s32.totalorder %s47, %s50
      %p56 = scmp.eq.s32.totalorder %s23, 0
      %p57 = por %p55, %p56
      %p58 = scmp.ne.s32.totalorder %s47, %s50
      %p59 = scmp.eq.s32.totalorder %s28, 1
      %p60 = por %p58, %p59
      %p61 = scmp.ne.s32.totalorder %s50, %s51
      %p62 = scmp.eq.s32.totalorder %s28, 0
      %p63 = por %p61, %p62
      %p64 = scmp.ne.s32.totalorder %s50, %s51
      %p65 = scmp.eq.s32.totalorder %s29, 1
      %p66 = por %p64, %p65
      %p68 = scmp.ne.s32.totalorder %s51, %s67
      %p69 = scmp.eq.s32.totalorder %s29, 0
      %p70 = por %p68, %p69
      %s72 = sadd.s32 %s71, 1
      %p75 = scmp.eq.s32.totalorder %s23, 1
      %p76 = scmp.ne.s32.totalorder %s71, %s73
      %p77 = scmp.eq.s32.totalorder %s23, 0
      %p78 = por %p76, %p77
      %p79 = scmp.ne.s32.totalorder %s71, %s73
      %p80 = scmp.eq.s32.totalorder %s28, 1
      %p81 = por %p79, %p80
      %p82 = scmp.ne.s32.totalorder %s73, %s74
      %p83 = scmp.eq.s32.totalorder %s28, 0
      %p84 = por %p82, %p83
      %p85 = scmp.ne.s32.totalorder %s73, %s74
      %p86 = scmp.eq.s32.totalorder %s29, 1
      %p87 = por %p85, %p86
      %p89 = scmp.ne.s32.totalorder %s74, %s88
      %p90 = scmp.eq.s32.totalorder %s29, 0
      %p91 = por %p89, %p90
      %s93 = sadd.s32 %s92, 1
      %p96 = scmp.eq.s32.totalorder %s23, 1
      %p97 = scmp.ne.s32.totalorder %s92, %s94
      %p98 = scmp.eq.s32.totalorder %s23, 0
      %p99 = por %p97, %p98
      %p100 = scmp.ne.s32.totalorder %s92, %s94
      %p101 = scmp.eq.s32.totalorder %s28, 1
      %p102 = por %p100, %p101
      %p103 = scmp.ne.s32.totalorder %s94, %s95
      %p104 = scmp.eq.s32.totalorder %s28, 0
      %p105 = por %p103, %p104
      %p106 = scmp.ne.s32.totalorder %s94, %s95
      %p107 = scmp.eq.s32.totalorder %s29, 1
      %p108 = por %p106, %p107
      %p110 = scmp.ne.s32.totalorder %s95, %s109
      %p111 = scmp.eq.s32.totalorder %s29, 0
      %p112 = por %p110, %p111
      %s114 = sadd.s32 %s113, 1
      %p117 = scmp.eq.s32.totalorder %s23, 1
      %p118 = scmp.ne.s32.totalorder %s113, %s115
      %p119 = scmp.eq.s32.totalorder %s23, 0
      %p120 = por %p118, %p119
      %p121 = scmp.ne.s32.totalorder %s113, %s115
      %p122 = scmp.eq.s32.totalorder %s28, 1
      %p123 = por %p121, %p122
      %p124 = scmp.ne.s32.totalorder %s115, %s116
      %p125 = scmp.eq.s32.totalorder %s28, 0
      %p126 = por %p124, %p125
      %p127 = scmp.ne.s32.totalorder %s115, %s116
      %p128 = scmp.eq.s32.totalorder %s29, 1
      %p129 = por %p127, %p128
      %p131 = scmp.ne.s32.totalorder %s116, %s130
      %p132 = scmp.eq.s32.totalorder %s29, 0
      %p133 = por %p131, %p132
      %s135 = sadd.s32 %s134, 1
      %p138 = scmp.eq.s32.totalorder %s23, 1
      %p139 = scmp.ne.s32.totalorder %s134, %s136
      %p140 = scmp.eq.s32.totalorder %s23, 0
      %p141 = por %p139, %p140
      %p142 = scmp.ne.s32.totalorder %s134, %s136
      %p143 = scmp.eq.s32.totalorder %s28, 1
      %p144 = por %p142, %p143
      %p145 = scmp.ne.s32.totalorder %s136, %s137
      %p146 = scmp.eq.s32.totalorder %s28, 0
      %p147 = por %p145, %p146
      %p148 = scmp.ne.s32.totalorder %s136, %s137
      %p149 = scmp.eq.s32.totalorder %s29, 1
      %p150 = por %p148, %p149
      %p152 = scmp.ne.s32.totalorder %s137, %s151
      %p153 = scmp.eq.s32.totalorder %s29, 0
      %p154 = por %p152, %p153
      %s156 = sadd.s32 %s155, 1
      %p159 = scmp.eq.s32.totalorder %s23, 1
      %p160 = scmp.ne.s32.totalorder %s155, %s157
      %p161 = scmp.eq.s32.totalorder %s23, 0
      %p162 = por %p160, %p161
      %p163 = scmp.ne.s32.totalorder %s155, %s157
      %p164 = scmp.eq.s32.totalorder %s28, 1
      %p165 = por %p163, %p164
      %p166 = scmp.ne.s32.totalorder %s157, %s158
      %p167 = scmp.eq.s32.totalorder %s28, 0
      %p168 = por %p166, %p167
      %p169 = scmp.ne.s32.totalorder %s157, %s158
      %p170 = scmp.eq.s32.totalorder %s29, 1
      %p171 = por %p169, %p170
      %p173 = scmp.ne.s32.totalorder %s158, %s172
      %p174 = scmp.eq.s32.totalorder %s29, 0
      %p175 = por %p173, %p174
      %s177 = sadd.s32 %s176, 1
      %p180 = scmp.eq.s32.totalorder %s23, 1
      %p181 = scmp.ne.s32.totalorder %s176, %s178
      %p182 = scmp.eq.s32.totalorder %s23, 0
      %p183 = por %p181, %p182
      %p184 = scmp.ne.s32.totalorder %s176, %s178
      %p185 = scmp.eq.s32.totalorder %s28, 1
      %p186 = por %p184, %p185
      %p187 = scmp.ne.s32.totalorder %s178, %s179
      %p188 = scmp.eq.s32.totalorder %s28, 0
      %p189 = por %p187, %p188
      %p190 = scmp.ne.s32.totalorder %s178, %s179
      %p191 = scmp.eq.s32.totalorder %s29, 1
      %p192 = por %p190, %p191
      %p194 = scmp.ne.s32.totalorder %s179, %s193
      %p195 = scmp.eq.s32.totalorder %s29, 0
      %p196 = por %p194, %p195
      %s197 = ssub.s32 %s30, %s42
      %s198 = ssub.s32 %s31, %s38
      %s199 = sor.u32 %s197, %s198
      %p200 = scmp.eq.s32.totalorder %s199, 0
      %s202 = sadd.s32 %s201, 1
      %s203 = scalar_select %p200, %s201, %s202
      %p206 = pneg %p200
      %p207 = scmp.eq.s32.totalorder %s23, 1
      %p208 = por %p206, %p207
      %p209 = scmp.ne.s32.totalorder %s201, %s204
      %p210 = scmp.eq.s32.totalorder %s23, 0
      %p211 = por %p209, %p210
      %p212 = scmp.ne.s32.totalorder %s201, %s204
      %p213 = scmp.eq.s32.totalorder %s28, 1
      %p214 = por %p212, %p213
      %p215 = scmp.ne.s32.totalorder %s204, %s205
      %p216 = scmp.eq.s32.totalorder %s28, 0
      %p217 = por %p215, %p216
      %p218 = scmp.ne.s32.totalorder %s204, %s205
      %p219 = scmp.eq.s32.totalorder %s29, 1
      %p220 = por %p218, %p219
      %p222 = scmp.ne.s32.totalorder %s205, %s221
      %p223 = scmp.eq.s32.totalorder %s29, 0
      %p224 = por %p222, %p223
      %s225 = ssub.s32 %s30, %s42
      %s226 = ssub.s32 %s31, %s38
      %s227 = sor.u32 %s225, %s226
      %p228 = scmp.eq.s32.totalorder %s227, 0
      %s230 = sadd.s32 %s229, 1
      %s231 = scalar_select %p228, %s229, %s230
      %p234 = pneg %p228
      %p235 = scmp.eq.s32.totalorder %s23, 1
      %p236 = por %p234, %p235
      %p237 = scmp.ne.s32.totalorder %s229, %s232
      %p238 = scmp.eq.s32.totalorder %s23, 0
      %p239 = por %p237, %p238
      %p240 = scmp.ne.s32.totalorder %s229, %s232
      %p241 = scmp.eq.s32.totalorder %s28, 1
      %p242 = por %p240, %p241
      %p243 = scmp.ne.s32.totalorder %s232, %s233
      %p244 = scmp.eq.s32.totalorder %s28, 0
      %p245 = por %p243, %p244
      %p246 = scmp.ne.s32.totalorder %s232, %s233
      %p247 = scmp.eq.s32.totalorder %s29, 1
      %p248 = por %p246, %p247
      %p250 = scmp.ne.s32.totalorder %s233, %s249
      %p251 = scmp.eq.s32.totalorder %s29, 0
      %p252 = por %p250, %p251
      %s253 = ssub.s32 %s30, %s42
      %s254 = ssub.s32 %s31, %s38
      %s255 = sor.u32 %s253, %s254
      %p256 = scmp.eq.s32.totalorder %s255, 0
      %s258 = sadd.s32 %s257, 1
      %s259 = scalar_select %p256, %s257, %s258
      %p262 = pneg %p256
      %p263 = scmp.eq.s32.totalorder %s23, 1
      %p264 = por %p262, %p263
      %p265 = scmp.ne.s32.totalorder %s257, %s260
      %p266 = scmp.eq.s32.totalorder %s23, 0
      %p267 = por %p265, %p266
      %p268 = scmp.ne.s32.totalorder %s257, %s260
      %p269 = scmp.eq.s32.totalorder %s28, 1
      %p270 = por %p268, %p269
      %p271 = scmp.ne.s32.totalorder %s260, %s261
      %p272 = scmp.eq.s32.totalorder %s28, 0
      %p273 = por %p271, %p272
      %p274 = scmp.ne.s32.totalorder %s260, %s261
      %p275 = scmp.eq.s32.totalorder %s29, 1
      %p276 = por %p274, %p275
      %p278 = scmp.ne.s32.totalorder %s261, %s277
      %p279 = scmp.eq.s32.totalorder %s29, 0
      %p280 = por %p278, %p279
      %p281 = scmp.le.s32.totalorder 1, %s23
      %p282 = scmp.lt.s32.totalorder %s23, 3
      %p283 = pnand %p281, %p282
      %p284 = pneg %p283
      // Predicated region
      $region9: #{tpu_custom_call.1} parent=5 // pred_check
        _
      $region10: #{tpu_custom_call.1} parent=5 // pred_check_branch
        %286 = sbr.rel (%p283) target = $region12
      $region11: #{tpu_custom_call.1} parent=5 // pred_region
        %s287 = ssub.s32 %s23, 1
        // Predicated region
        $region13: #{tpu_custom_call.1} parent=11 // pred_check
          %p288 = pneg %p84
        $region14: #{tpu_custom_call.1} parent=11 // pred_check_branch
          %290 = sbr.rel (%p288) target = $region16
        $region15: #{tpu_custom_call.1} parent=11 // pred_region
          _
        $region16: #{tpu_custom_call.1} parent=11 // pred_fallthru
          _
        // Predicated region
        $region17: #{tpu_custom_call.1} parent=11 // pred_check
          %p291 = pneg %p105
        $region18: #{tpu_custom_call.1} parent=11 // pred_check_branch
          %293 = sbr.rel (%p291) target = $region20
        $region19: #{tpu_custom_call.1} parent=11 // pred_region
          _
        $region20: #{tpu_custom_call.1} parent=11 // pred_fallthru
          _
        // Predicated region
        $region21: #{tpu_custom_call.1} parent=11 // pred_check
          %p294 = pneg %p126
        $region22: #{tpu_custom_call.1} parent=11 // pred_check_branch
          %296 = sbr.rel (%p294) target = $region24
        $region23: #{tpu_custom_call.1} parent=11 // pred_region
          %298 = vsyncadd [#allocation6], 0
          %s300 = sshll.u32 %s3, 4
          %s301 = int_to_ptr.hbm [resolvable:$true] %s300
          %s302 = sshll.u32 [#allocation5], 4
          %s303 = int_to_ptr.vmem [resolvable:$true] %s302
          %305 = dma.hbm_to_vmem [thread:$0]  %s301, 64, %s303, [#allocation6]
        $region24: #{tpu_custom_call.1} parent=11 // pred_fallthru
          _
        // Predicated region
        $region25: #{tpu_custom_call.1} parent=11 // pred_check
          %p306 = pneg %p147
        $region26: #{tpu_custom_call.1} parent=11 // pred_check_branch
          %308 = sbr.rel (%p306) target = $region28
        $region27: #{tpu_custom_call.1} parent=11 // pred_region
          _
        $region28: #{tpu_custom_call.1} parent=11 // pred_fallthru
          _
        // Predicated region
        $region29: #{tpu_custom_call.1} parent=11 // pred_check
          %p309 = pneg %p168
        $region30: #{tpu_custom_call.1} parent=11 // pred_check_branch
          %311 = sbr.rel (%p309) target = $region32
        $region31: #{tpu_custom_call.1} parent=11 // pred_region
          %313 = vsyncadd [#allocation6], 0
          %s315 = sshll.u32 %s5, 4
          %s316 = int_to_ptr.hbm [resolvable:$true] %s315
          %s317 = sshll.u32 [#allocation7], 4
          %s318 = int_to_ptr.vmem [resolvable:$true] %s317
          %320 = dma.hbm_to_vmem [thread:$0]  %s316, 64, %s318, [#allocation6]
        $region32: #{tpu_custom_call.1} parent=11 // pred_fallthru
          _
        // Predicated region
        $region33: #{tpu_custom_call.1} parent=11 // pred_check
          %p321 = pneg %p189
        $region34: #{tpu_custom_call.1} parent=11 // pred_check_branch
          %323 = sbr.rel (%p321) target = $region36
        $region35: #{tpu_custom_call.1} parent=11 // pred_region
          _
        $region36: #{tpu_custom_call.1} parent=11 // pred_fallthru
          _
      $region12: #{tpu_custom_call.1} parent=5 // pred_fallthru
        _
      %p324 = scmp.lt.s32.totalorder %s23, 2
      // Predicated region
      $region37: #{tpu_custom_call.1} parent=5 // pred_check
        %p325 = pneg %p324
      $region38: #{tpu_custom_call.1} parent=5 // pred_check_branch
        %327 = sbr.rel (%p325) target = $region40
      $region39: #{tpu_custom_call.1} parent=5 // pred_region
        // Predicated region
        $region41: #{tpu_custom_call.1} parent=39 // pred_check
          %p328 = pneg %p57
        $region42: #{tpu_custom_call.1} parent=39 // pred_check_branch
          %330 = sbr.rel (%p328) target = $region44
        $region43: #{tpu_custom_call.1} parent=39 // pred_region
          %s331 = sand.u32 %s47, 1
          %s332 = scalar_lea.sflag [#allocation3], %s331
          %s333 = sand.u32 %s47, 1
          %s334 = smul.addr %s333, 8
          %s335 = scalar_lea.vmem [#allocation2], %s334
          %s336 = smul.u32 2, %s31
          %338 = vsyncadd %s332, 0
          %s339 = smul.addr %s30, 2
          %s340 = sadd.s32 %s336, %s339
          %s341 = smul.addr %s340, 4
          %s342 = scalar_lea.hbm %s0, %s341
          %s344 = sshll.u32 %s342, 4
          %s345 = int_to_ptr.hbm [resolvable:$true] %s344
          %s346 = sshll.u32 %s335, 4
          %s347 = int_to_ptr.vmem [resolvable:$true] %s346
          %349 = dma.hbm_to_vmem [thread:$0]  %s345, 128, %s347, %s332
        $region44: #{tpu_custom_call.1} parent=39 // pred_fallthru
          _
      $region40: #{tpu_custom_call.1} parent=5 // pred_fallthru
        _
      %p350 = scmp.le.s32.totalorder 1, %s23
      %p351 = scmp.lt.s32.totalorder %s23, 3
      %p352 = pnand %p350, %p351
      %p353 = pneg %p352
      // Predicated region
      $region45: #{tpu_custom_call.1} parent=5 // pred_check
        _
      $region46: #{tpu_custom_call.1} parent=5 // pred_check_branch
        %355 = sbr.rel (%p352) target = $region48
      $region47: #{tpu_custom_call.1} parent=5 // pred_region
        %s356 = ssub.s32 %s23, 1
        %s357 = sand.u32 %s50, 1
        %s358 = scalar_lea.sflag [#allocation3], %s357
        %s359 = sand.u32 %s50, 1
        %s360 = smul.addr %s359, 8
        %s361 = scalar_lea.vmem [#allocation2], %s360
        // Predicated region
        $region49: #{tpu_custom_call.1} parent=47 // pred_check
          %p362 = pneg %p63
        $region50: #{tpu_custom_call.1} parent=47 // pred_check_branch
          %364 = sbr.rel (%p362) target = $region52
        $region51: #{tpu_custom_call.1} parent=47 // pred_region
          %366 = dma.done %s358, 128
        $region52: #{tpu_custom_call.1} parent=47 // pred_fallthru
          _
        // Predicated region
        $region53: #{tpu_custom_call.1} parent=47 // pred_check
          %p367 = pneg %p126
        $region54: #{tpu_custom_call.1} parent=47 // pred_check_branch
          %369 = sbr.rel (%p367) target = $region56
        $region55: #{tpu_custom_call.1} parent=47 // pred_region
          %371 = dma.done [#allocation6], 64
        $region56: #{tpu_custom_call.1} parent=47 // pred_fallthru
          _
        // Predicated region
        $region57: #{tpu_custom_call.1} parent=47 // pred_check
          %p372 = pneg %p168
        $region58: #{tpu_custom_call.1} parent=47 // pred_check_branch
          %374 = sbr.rel (%p372) target = $region60
        $region59: #{tpu_custom_call.1} parent=47 // pred_region
          %376 = dma.done [#allocation6], 64
        $region60: #{tpu_custom_call.1} parent=47 // pred_fallthru
          _
        %s377 = sand.u32 %s50, 1
        %s378 = scalar_lea.sflag [#allocation3], %s377
        %s379 = sand.u32 %s50, 1
        %s380 = smul.addr %s379, 8
        %s381 = scalar_lea.vmem [#allocation2], %s380
        %p382 = pneg %p63
        %p383 = pneg %p60
        %p384 = pneg %p84
        %p385 = pneg %p81
        %p386 = pneg %p105
        %p387 = pneg %p102
        %p388 = pneg %p126
        %p389 = pneg %p123
        %p390 = pneg %p147
        %p391 = pneg %p144
        %p392 = pneg %p168
        %p393 = pneg %p165
        %p394 = pneg %p189
        %p395 = pneg %p186
        %p396 = pneg %p217
        %p397 = pneg %p214
        %s398 = smul.u32 32, %s33
        %p399 = scmp.lt.s32.totalorder %s32, 1
        %s400 = scalar_select %p399, %s32, 1
        %p401 = scmp.lt.s32.totalorder %s398, 31
        %s402 = scalar_select %p401, %s398, 31
        %s403 = smul.addr %s400, 32
        %s404 = sadd.s32 %s402, %s403
        %s405 = smul.addr %s404, 8
        %s406 = scalar_lea.vmem %s7, %s405
        %p407 = pneg %p245
        %p408 = pneg %p242
        %s409 = sand.u32 %s232, 1
        %s410 = scalar_lea.sflag [#allocation4], %s409
        %s411 = sand.u32 %s232, 1
        %s412 = smul.addr %s411, 8
        %s413 = scalar_lea.vmem [#allocation8], %s412
        %p414 = pneg %p273
        %p415 = pneg %p270
        %s416 = smul.u32 32, %s33
        %p417 = scmp.lt.s32.totalorder %s32, 1
        %s418 = scalar_select %p417, %s32, 1
        %p419 = scmp.lt.s32.totalorder %s416, 31
        %s420 = scalar_select %p419, %s416, 31
        %s421 = smul.addr %s418, 32
        %s422 = sadd.s32 %s420, %s421
        %s423 = smul.addr %s422, 8
        %s424 = scalar_lea.vmem %s9, %s423
        %s425 = smul.u32 2, %s33
        %s426 = smul.u32 32, %s33
        %p427 = scmp.lt.s32.totalorder %s32, 1
        %s428 = scalar_select %p427, %s32, 1
        %p429 = scmp.lt.s32.totalorder %s426, 31
        %s430 = scalar_select %p429, %s426, 31
        %s431 = smul.addr %s428, 32
        %s432 = sadd.s32 %s430, %s431
        %s433 = smul.addr %s432, 8
        %s434 = scalar_lea.vmem %s7, %s433
        %s435 = smul.u32 32, %s33
        %s436 = smul.u32 2, %s33
        %s437 = smul.u32 32, %s33
        %p438 = scmp.lt.s32.totalorder %s32, 1
        %s439 = scalar_select %p438, %s32, 1
        %p440 = scmp.lt.s32.totalorder %s437, 31
        %s441 = scalar_select %p440, %s437, 31
        %s442 = smul.addr %s439, 32
        %s443 = sadd.s32 %s441, %s442
        %s444 = smul.addr %s443, 8
        %s445 = scalar_lea.vmem %s9, %s444
        %s446 = smul.u32 32, %s33
        %v447 = vld [vmem:[%s361] sm:$0xff]
        %449 = vst [vmem:[#allocation1] ss:$2 sm:$0xff] %v447
        %v450 = vld.sshfl [vmem:[#allocation1] sm:$0xff pattern:$0x75316420]
        %v451 = vld.sshfl [vmem:[#allocation1 + $0x8] sm:$0xff pattern:$0x75316420]
        %vm454 = vcmask 1043456
        %v455 = vsel %vm454, %v450, 0.0
        %v456 = vrot.slane %v455, 4
        %v457 = vadd.f32 %v455, %v456
        %v458 = vrot.slane %v457, 2
        %v459 = vadd.f32 %v457, %v458
        %v460 = vrot.slane %v459, 1
        %v461 = vadd.f32 %v459, %v460
        %v462 = vsel %vm454, %v451, 0.0
        %v463 = vrot.slane %v462, 4
        %v464 = vadd.f32 %v462, %v463
        %v465 = vrot.slane %v464, 2
        %v466 = vadd.f32 %v464, %v465
        %v467 = vrot.slane %v466, 1
        %v468 = vadd.f32 %v466, %v467
        %v469 = vrcp.pop 4.0
        %v470 = vmul.f32 4.0, %v469
        %v471 = vsub.f32 1.0, %v470
        %v472 = vmul.f32 %v469, %v471
        %v473 = vadd.f32 %v469, %v472
        %vm474 = vweird.f32 %v469
        %v475 = vsel %vm474, %v469, %v473
        %v476 = vmul.f32 %v461, %v475
        %v477 = vmul.f32 %v468, %v475
        %v480 = vrot.slane %v477, 4
        %v481 = vsel %vm454, %v476, %v480
        %v483 = vsub.f32 %v447, %v481
        %v484 = vmul.f32 %v483, %v483
        %486 = vst [vmem:[#allocation1] ss:$2 sm:$0xff] %v484
        %v487 = vld.sshfl [vmem:[#allocation1] sm:$0xff pattern:$0x75316420]
        %v488 = vld.sshfl [vmem:[#allocation1 + $0x8] sm:$0xff pattern:$0x75316420]
        %v491 = vsel %vm454, %v487, 0.0
        %v492 = vrot.slane %v491, 4
        %v493 = vadd.f32 %v491, %v492
        %v494 = vrot.slane %v493, 2
        %v495 = vadd.f32 %v493, %v494
        %v496 = vrot.slane %v495, 1
        %v497 = vadd.f32 %v495, %v496
        %v498 = vsel %vm454, %v488, 0.0
        %v499 = vrot.slane %v498, 4
        %v500 = vadd.f32 %v498, %v499
        %v501 = vrot.slane %v500, 2
        %v502 = vadd.f32 %v500, %v501
        %v503 = vrot.slane %v502, 1
        %v504 = vadd.f32 %v502, %v503
        %v505 = vmul.f32 %v497, %v475
        %v506 = vmul.f32 %v504, %v475
        %v507 = vadd.f32 %v505, 1e-06
        %v508 = vadd.f32 %v506, 1e-06
        %v509 = vrsqrt.pop %v507
        %v510 = vmul.f32 %v509, %v507
        %v511 = vmul.f32 %v510, %v509
        %v512 = vmul.f32 0.5, %v511
        %v513 = vsub.f32 1.5, %v512
        %v514 = vmul.f32 %v509, %v513
        %vm515 = vweird.f32 %v507
        %vm516 = vweird.f32 %v509
        %vm517 = vmor %vm515, %vm516
        %v518 = vsel %vm517, %v509, %v514
        %v519 = vrsqrt.pop %v508
        %v520 = vmul.f32 %v519, %v508
        %v521 = vmul.f32 %v520, %v519
        %v522 = vmul.f32 0.5, %v521
        %v523 = vsub.f32 1.5, %v522
        %v524 = vmul.f32 %v519, %v523
        %vm525 = vweird.f32 %v508
        %vm526 = vweird.f32 %v519
        %vm527 = vmor %vm525, %vm526
        %v528 = vsel %vm527, %v519, %v524
        %v531 = vrot.slane %v528, 4
        %v532 = vsel %vm454, %v518, %v531
        %v534 = vmul.f32 %v483, %v532
        %v535 = vld [vmem:[%s1] sm:$0xf]
        %v536 = vld [vmem:[%s2] sm:$0xf]
        %538 = vset.pattern.permute.xlu0 0
        %539 = vperm.xlu0 %538, %v536
        %v540 = vpop.permute.xlu0 %539
        %543 = vst [vmem:[#allocation1] ss:$2 sm:$0xff] %v534
        %v544 = vld.sshfl [vmem:[#allocation1] sm:$0xff pattern:$0x75316420]
        %v545 = vld.sshfl [vmem:[#allocation1 + $0x8] sm:$0xff pattern:$0x75316420]
        %vm546 = vcmask 31744
        %v548 = vsel %vm546, %v535, 0
        %v550 = vsel %vm454, %v544, 0
        %v552 = vsel %vm454, %v545, 0
        %554 = vmatpush.msra.mxu0 0.0
        %555 = vmatpush.msra.mxu0 0.0
        %556 = vmatpush.msra.mxu0 0.0
        %557 = vmatpush.msra.mxu0 0.0
        %558 = vmatpush.msra.mxu0 0.0
        %559 = vmatpush.msra.mxu0 0.0
        %560 = vmatpush.msra.mxu0 0.0
        %561 = vmatpush.msra.mxu0 0.0
        %562 = vmatpush.msra.mxu0 0.0
        %563 = vmatpush.msra.mxu0 0.0
        %564 = vmatpush.msra.mxu0 0.0
        %565 = vmatpush.msra.mxu0 0.0
        %566 = vmatpush.msra.mxu0 0.0
        %567 = vmatpush.msra.mxu0 0.0
        %568 = vmatpush.msra.mxu0 0.0
        %569 = vmatpush.msra.mxu0 %v550
        %570 = vmatmul.f32.gmra.mxu0 %v548
        %v571 = vpop.f32.mrf.mxu0
        %v572 = vadd.f32 %v540, %v571
        %573 = vdwg.mxu0
        %574 = vmatpush.msra.mxu0 0.0
        %575 = vmatpush.msra.mxu0 0.0
        %576 = vmatpush.msra.mxu0 0.0
        %577 = vmatpush.msra.mxu0 0.0
        %578 = vmatpush.msra.mxu0 0.0
        %579 = vmatpush.msra.mxu0 0.0
        %580 = vmatpush.msra.mxu0 0.0
        %581 = vmatpush.msra.mxu0 0.0
        %582 = vmatpush.msra.mxu0 0.0
        %583 = vmatpush.msra.mxu0 0.0
        %584 = vmatpush.msra.mxu0 0.0
        %585 = vmatpush.msra.mxu0 0.0
        %586 = vmatpush.msra.mxu0 0.0
        %587 = vmatpush.msra.mxu0 0.0
        %588 = vmatpush.msra.mxu0 0.0
        %589 = vmatpush.msra.mxu0 %v552
        %590 = vmatmul.f32.gmra.mxu0 %v548
        %v591 = vpop.f32.mrf.mxu0
        %v592 = vadd.f32 %v540, %v591
        %593 = vdwg.mxu0
        %v596 = vrot.slane %v592, 4
        %v597 = vsel %vm454, %v572, %v596
        %599 = vst [vmem:[%s413] sm:$0xff] %v597
        %v600 = vld [vmem:[#allocation5] sm:$0xf]
        %v601 = vld [vmem:[%s4] sm:$0x1]
        %v603 = vperm.slane %v601, 0
        %605 = vst [vmem:[#allocation1] ss:$2 sm:$0xff] %v534
        %v606 = vld.sshfl [vmem:[#allocation1] sm:$0xff pattern:$0x75316420]
        %v607 = vld.sshfl [vmem:[#allocation1 + $0x8] sm:$0xff pattern:$0x75316420]
        %610 = vxpose.xlu0.b32.start [1/16] %v606, 128
        %611 = vxpose.xlu0.b32.cont [2/16] 0.0, 128
        %612 = vxpose.xlu0.b32.cont [3/16] 0.0, 128
        %613 = vxpose.xlu0.b32.cont [4/16] 0.0, 128
        %614 = vxpose.xlu0.b32.cont [5/16] 0.0, 128
        %615 = vxpose.xlu0.b32.cont [6/16] 0.0, 128
        %616 = vxpose.xlu0.b32.cont [7/16] 0.0, 128
        %617 = vxpose.xlu0.b32.cont [8/16] 0.0, 128
        %618 = vxpose.xlu0.b32.cont [9/16] 0.0, 128
        %619 = vxpose.xlu0.b32.cont [10/16] 0.0, 128
        %620 = vxpose.xlu0.b32.cont [11/16] 0.0, 128
        %621 = vxpose.xlu0.b32.cont [12/16] 0.0, 128
        %622 = vxpose.xlu0.b32.cont [13/16] 0.0, 128
        %623 = vxpose.xlu0.b32.cont [14/16] 0.0, 128
        %624 = vxpose.xlu0.b32.cont [15/16] 0.0, 128
        %625 = vxpose.xlu0.b32.end [16/16] 0.0, 128
        %v626 = vpop.trf.xlu0
        %v627 = vpop.trf.xlu0
        %v628 = vpop.trf.xlu0
        %v629 = vpop.trf.xlu0
        %v630 = vpop.trf.xlu0
        %v631 = vpop.trf.xlu0
        %v632 = vpop.trf.xlu0
        %v633 = vpop.trf.xlu0
        %v634 = vpop.trf.xlu0
        %v635 = vpop.trf.xlu0
        %v636 = vpop.trf.xlu0
        %v637 = vpop.trf.xlu0
        %v638 = vpop.trf.xlu0
        %v639 = vpop.trf.xlu0
        %v640 = vpop.trf.xlu0
        %v641 = vpop.trf.xlu0
        %642 = vxpose.xlu0.b32.start [1/16] %v607, 128
        %643 = vxpose.xlu0.b32.cont [2/16] 0.0, 128
        %644 = vxpose.xlu0.b32.cont [3/16] 0.0, 128
        %645 = vxpose.xlu0.b32.cont [4/16] 0.0, 128
        %646 = vxpose.xlu0.b32.cont [5/16] 0.0, 128
        %647 = vxpose.xlu0.b32.cont [6/16] 0.0, 128
        %648 = vxpose.xlu0.b32.cont [7/16] 0.0, 128
        %649 = vxpose.xlu0.b32.cont [8/16] 0.0, 128
        %650 = vxpose.xlu0.b32.cont [9/16] 0.0, 128
        %651 = vxpose.xlu0.b32.cont [10/16] 0.0, 128
        %652 = vxpose.xlu0.b32.cont [11/16] 0.0, 128
        %653 = vxpose.xlu0.b32.cont [12/16] 0.0, 128
        %654 = vxpose.xlu0.b32.cont [13/16] 0.0, 128
        %655 = vxpose.xlu0.b32.cont [14/16] 0.0, 128
        %656 = vxpose.xlu0.b32.cont [15/16] 0.0, 128
        %657 = vxpose.xlu0.b32.end [16/16] 0.0, 128
        %v658 = vpop.trf.xlu0
        %v659 = vpop.trf.xlu0
        %v660 = vpop.trf.xlu0
        %v661 = vpop.trf.xlu0
        %v662 = vpop.trf.xlu0
        %v663 = vpop.trf.xlu0
        %v664 = vpop.trf.xlu0
        %v665 = vpop.trf.xlu0
        %v666 = vpop.trf.xlu0
        %v667 = vpop.trf.xlu0
        %v668 = vpop.trf.xlu0
        %v669 = vpop.trf.xlu0
        %v670 = vpop.trf.xlu0
        %v671 = vpop.trf.xlu0
        %v672 = vpop.trf.xlu0
        %v673 = vpop.trf.xlu0
        %v675 = vsel %vm546, %v626, 0
        %v678 = vsel %vm546, %v627, 0
        %v681 = vsel %vm546, %v628, 0
        %v684 = vsel %vm546, %v629, 0
        %v687 = vsel %vm546, %v630, 0
        %v690 = vsel %vm546, %v631, 0
        %v693 = vsel %vm546, %v632, 0
        %v696 = vsel %vm546, %v633, 0
        %v699 = vsel %vm546, %v634, 0
        %v702 = vsel %vm546, %v635, 0
        %v705 = vsel %vm546, %v636, 0
        %v708 = vsel %vm546, %v637, 0
        %v711 = vsel %vm546, %v638, 0
        %v714 = vsel %vm546, %v639, 0
        %v717 = vsel %vm546, %v640, 0
        %v720 = vsel %vm546, %v641, 0
        %v723 = vsel %vm546, %v658, 0
        %v726 = vsel %vm546, %v659, 0
        %v729 = vsel %vm546, %v660, 0
        %v732 = vsel %vm546, %v661, 0
        %v735 = vsel %vm546, %v662, 0
        %v738 = vsel %vm546, %v663, 0
        %v741 = vsel %vm546, %v664, 0
        %v744 = vsel %vm546, %v665, 0
        %v747 = vsel %vm546, %v666, 0
        %v750 = vsel %vm546, %v667, 0
        %v753 = vsel %vm546, %v668, 0
        %v756 = vsel %vm546, %v669, 0
        %v759 = vsel %vm546, %v670, 0
        %v762 = vsel %vm546, %v671, 0
        %v765 = vsel %vm546, %v672, 0
        %v768 = vsel %vm546, %v673, 0
        %v771 = vsel %vm454, %v600, 0
        %773 = vmatpush.msra.mxu0 0.0
        %774 = vmatpush.msra.mxu0 0.0
        %775 = vmatpush.msra.mxu0 0.0
        %776 = vmatpush.msra.mxu0 0.0
        %777 = vmatpush.msra.mxu0 0.0
        %778 = vmatpush.msra.mxu0 0.0
        %779 = vmatpush.msra.mxu0 0.0
        %780 = vmatpush.msra.mxu0 0.0
        %781 = vmatpush.msra.mxu0 0.0
        %782 = vmatpush.msra.mxu0 0.0
        %783 = vmatpush.msra.mxu0 0.0
        %784 = vmatpush.msra.mxu0 0.0
        %785 = vmatpush.msra.mxu0 0.0
        %786 = vmatpush.msra.mxu0 0.0
        %787 = vmatpush.msra.mxu0 0.0
        %788 = vmatpush.msra.mxu0 %v771
        %789 = vmatmul.f32.gmra.mxu0 %v675
        %v790 = vpop.f32.mrf.mxu0
        %v791 = vadd.f32 %v603, %v790
        %792 = vmatmul.f32.gmra.mxu0 %v678
        %v793 = vpop.f32.mrf.mxu0
        %v794 = vadd.f32 %v603, %v793
        %795 = vmatmul.f32.gmra.mxu0 %v681
        %v796 = vpop.f32.mrf.mxu0
        %v797 = vadd.f32 %v603, %v796
        %798 = vmatmul.f32.gmra.mxu0 %v684
        %v799 = vpop.f32.mrf.mxu0
        %v800 = vadd.f32 %v603, %v799
        %801 = vmatmul.f32.gmra.mxu0 %v687
        %v802 = vpop.f32.mrf.mxu0
        %v803 = vadd.f32 %v603, %v802
        %804 = vmatmul.f32.gmra.mxu0 %v690
        %v805 = vpop.f32.mrf.mxu0
        %v806 = vadd.f32 %v603, %v805
        %807 = vmatmul.f32.gmra.mxu0 %v693
        %v808 = vpop.f32.mrf.mxu0
        %v809 = vadd.f32 %v603, %v808
        %810 = vmatmul.f32.gmra.mxu0 %v696
        %v811 = vpop.f32.mrf.mxu0
        %v812 = vadd.f32 %v603, %v811
        %813 = vmatmul.f32.gmra.mxu0 %v699
        %v814 = vpop.f32.mrf.mxu0
        %v815 = vadd.f32 %v603, %v814
        %816 = vmatmul.f32.gmra.mxu0 %v702
        %v817 = vpop.f32.mrf.mxu0
        %v818 = vadd.f32 %v603, %v817
        %819 = vmatmul.f32.gmra.mxu0 %v705
        %v820 = vpop.f32.mrf.mxu0
        %v821 = vadd.f32 %v603, %v820
        %822 = vmatmul.f32.gmra.mxu0 %v708
        %v823 = vpop.f32.mrf.mxu0
        %v824 = vadd.f32 %v603, %v823
        %825 = vmatmul.f32.gmra.mxu0 %v711
        %v826 = vpop.f32.mrf.mxu0
        %v827 = vadd.f32 %v603, %v826
        %828 = vmatmul.f32.gmra.mxu0 %v714
        %v829 = vpop.f32.mrf.mxu0
        %v830 = vadd.f32 %v603, %v829
        %831 = vmatmul.f32.gmra.mxu0 %v717
        %v832 = vpop.f32.mrf.mxu0
        %v833 = vadd.f32 %v603, %v832
        %834 = vmatmul.f32.gmra.mxu0 %v720
        %v835 = vpop.f32.mrf.mxu0
        %v836 = vadd.f32 %v603, %v835
        %837 = vmatmul.f32.gmra.mxu0 %v723
        %v838 = vpop.f32.mrf.mxu0
        %v839 = vadd.f32 %v603, %v838
        %840 = vmatmul.f32.gmra.mxu0 %v726
        %v841 = vpop.f32.mrf.mxu0
        %v842 = vadd.f32 %v603, %v841
        %843 = vmatmul.f32.gmra.mxu0 %v729
        %v844 = vpop.f32.mrf.mxu0
        %v845 = vadd.f32 %v603, %v844
        %846 = vmatmul.f32.gmra.mxu0 %v732
        %v847 = vpop.f32.mrf.mxu0
        %v848 = vadd.f32 %v603, %v847
        %849 = vmatmul.f32.gmra.mxu0 %v735
        %v850 = vpop.f32.mrf.mxu0
        %v851 = vadd.f32 %v603, %v850
        %852 = vmatmul.f32.gmra.mxu0 %v738
        %v853 = vpop.f32.mrf.mxu0
        %v854 = vadd.f32 %v603, %v853
        %855 = vmatmul.f32.gmra.mxu0 %v741
        %v856 = vpop.f32.mrf.mxu0
        %v857 = vadd.f32 %v603, %v856
        %858 = vmatmul.f32.gmra.mxu0 %v744
        %v859 = vpop.f32.mrf.mxu0
        %v860 = vadd.f32 %v603, %v859
        %861 = vmatmul.f32.gmra.mxu0 %v747
        %v862 = vpop.f32.mrf.mxu0
        %v863 = vadd.f32 %v603, %v862
        %864 = vmatmul.f32.gmra.mxu0 %v750
        %v865 = vpop.f32.mrf.mxu0
        %v866 = vadd.f32 %v603, %v865
        %867 = vmatmul.f32.gmra.mxu0 %v753
        %v868 = vpop.f32.mrf.mxu0
        %v869 = vadd.f32 %v603, %v868
        %870 = vmatmul.f32.gmra.mxu0 %v756
        %v871 = vpop.f32.mrf.mxu0
        %v872 = vadd.f32 %v603, %v871
        %873 = vmatmul.f32.gmra.mxu0 %v759
        %v874 = vpop.f32.mrf.mxu0
        %v875 = vadd.f32 %v603, %v874
        %876 = vmatmul.f32.gmra.mxu0 %v762
        %v877 = vpop.f32.mrf.mxu0
        %v878 = vadd.f32 %v603, %v877
        %879 = vmatmul.f32.gmra.mxu0 %v765
        %v880 = vpop.f32.mrf.mxu0
        %v881 = vadd.f32 %v603, %v880
        %882 = vmatmul.f32.gmra.mxu0 %v768
        %v883 = vpop.f32.mrf.mxu0
        %v884 = vadd.f32 %v603, %v883
        %885 = vdwg.mxu0
        %886 = vst.msk [vmem:[%s434] sm:$0xff] %vm546, %v791
        %887 = vst.msk [vmem:[%s434 + $0x8] sm:$0xff] %vm546, %v794
        %888 = vst.msk [vmem:[%s434 + $0x10] sm:$0xff] %vm546, %v797
        %889 = vst.msk [vmem:[%s434 + $0x18] sm:$0xff] %vm546, %v800
        %890 = vst.msk [vmem:[%s434 + $0x20] sm:$0xff] %vm546, %v803
        %891 = vst.msk [vmem:[%s434 + $0x28] sm:$0xff] %vm546, %v806
        %892 = vst.msk [vmem:[%s434 + $0x30] sm:$0xff] %vm546, %v809
        %893 = vst.msk [vmem:[%s434 + $0x38] sm:$0xff] %vm546, %v812
        %894 = vst.msk [vmem:[%s434 + $0x40] sm:$0xff] %vm546, %v815
        %895 = vst.msk [vmem:[%s434 + $0x48] sm:$0xff] %vm546, %v818
        %896 = vst.msk [vmem:[%s434 + $0x50] sm:$0xff] %vm546, %v821
        %897 = vst.msk [vmem:[%s434 + $0x58] sm:$0xff] %vm546, %v824
        %898 = vst.msk [vmem:[%s434 + $0x60] sm:$0xff] %vm546, %v827
        %899 = vst.msk [vmem:[%s434 + $0x68] sm:$0xff] %vm546, %v830
        %900 = vst.msk [vmem:[%s434 + $0x70] sm:$0xff] %vm546, %v833
        %901 = vst.msk [vmem:[%s434 + $0x78] sm:$0xff] %vm546, %v836
        %902 = vst.msk [vmem:[%s434 + $0x80] sm:$0xff] %vm546, %v839
        %903 = vst.msk [vmem:[%s434 + $0x88] sm:$0xff] %vm546, %v842
        %904 = vst.msk [vmem:[%s434 + $0x90] sm:$0xff] %vm546, %v845
        %905 = vst.msk [vmem:[%s434 + $0x98] sm:$0xff] %vm546, %v848
        %906 = vst.msk [vmem:[%s434 + $0xa0] sm:$0xff] %vm546, %v851
        %907 = vst.msk [vmem:[%s434 + $0xa8] sm:$0xff] %vm546, %v854
        %908 = vst.msk [vmem:[%s434 + $0xb0] sm:$0xff] %vm546, %v857
        %909 = vst.msk [vmem:[%s434 + $0xb8] sm:$0xff] %vm546, %v860
        %910 = vst.msk [vmem:[%s434 + $0xc0] sm:$0xff] %vm546, %v863
        %911 = vst.msk [vmem:[%s434 + $0xc8] sm:$0xff] %vm546, %v866
        %912 = vst.msk [vmem:[%s434 + $0xd0] sm:$0xff] %vm546, %v869
        %913 = vst.msk [vmem:[%s434 + $0xd8] sm:$0xff] %vm546, %v872
        %914 = vst.msk [vmem:[%s434 + $0xe0] sm:$0xff] %vm546, %v875
        %915 = vst.msk [vmem:[%s434 + $0xe8] sm:$0xff] %vm546, %v878
        %916 = vst.msk [vmem:[%s434 + $0xf0] sm:$0xff] %vm546, %v881
        %917 = vst.msk [vmem:[%s434 + $0xf8] sm:$0xff] %vm546, %v884
        %v918 = vld [vmem:[#allocation7] sm:$0xf]
        %v919 = vld [vmem:[%s6] sm:$0x1]
        %v921 = vperm.slane %v919, 0
        %v924 = vsel %vm454, %v918, 0
        %926 = vmatpush.msra.mxu0 0.0
        %927 = vmatpush.msra.mxu0 0.0
        %928 = vmatpush.msra.mxu0 0.0
        %929 = vmatpush.msra.mxu0 0.0
        %930 = vmatpush.msra.mxu0 0.0
        %931 = vmatpush.msra.mxu0 0.0
        %932 = vmatpush.msra.mxu0 0.0
        %933 = vmatpush.msra.mxu0 0.0
        %934 = vmatpush.msra.mxu0 0.0
        %935 = vmatpush.msra.mxu0 0.0
        %936 = vmatpush.msra.mxu0 0.0
        %937 = vmatpush.msra.mxu0 0.0
        %938 = vmatpush.msra.mxu0 0.0
        %939 = vmatpush.msra.mxu0 0.0
        %940 = vmatpush.msra.mxu0 0.0
        %941 = vmatpush.msra.mxu0 %v924
        %942 = vmatmul.f32.gmra.mxu0 %v675
        %v943 = vpop.f32.mrf.mxu0
        %v944 = vadd.f32 %v921, %v943
        %945 = vmatmul.f32.gmra.mxu0 %v678
        %v946 = vpop.f32.mrf.mxu0
        %v947 = vadd.f32 %v921, %v946
        %948 = vmatmul.f32.gmra.mxu0 %v681
        %v949 = vpop.f32.mrf.mxu0
        %v950 = vadd.f32 %v921, %v949
        %951 = vmatmul.f32.gmra.mxu0 %v684
        %v952 = vpop.f32.mrf.mxu0
        %v953 = vadd.f32 %v921, %v952
        %954 = vmatmul.f32.gmra.mxu0 %v687
        %v955 = vpop.f32.mrf.mxu0
        %v956 = vadd.f32 %v921, %v955
        %957 = vmatmul.f32.gmra.mxu0 %v690
        %v958 = vpop.f32.mrf.mxu0
        %v959 = vadd.f32 %v921, %v958
        %960 = vmatmul.f32.gmra.mxu0 %v693
        %v961 = vpop.f32.mrf.mxu0
        %v962 = vadd.f32 %v921, %v961
        %963 = vmatmul.f32.gmra.mxu0 %v696
        %v964 = vpop.f32.mrf.mxu0
        %v965 = vadd.f32 %v921, %v964
        %966 = vmatmul.f32.gmra.mxu0 %v699
        %v967 = vpop.f32.mrf.mxu0
        %v968 = vadd.f32 %v921, %v967
        %969 = vmatmul.f32.gmra.mxu0 %v702
        %v970 = vpop.f32.mrf.mxu0
        %v971 = vadd.f32 %v921, %v970
        %972 = vmatmul.f32.gmra.mxu0 %v705
        %v973 = vpop.f32.mrf.mxu0
        %v974 = vadd.f32 %v921, %v973
        %975 = vmatmul.f32.gmra.mxu0 %v708
        %v976 = vpop.f32.mrf.mxu0
        %v977 = vadd.f32 %v921, %v976
        %978 = vmatmul.f32.gmra.mxu0 %v711
        %v979 = vpop.f32.mrf.mxu0
        %v980 = vadd.f32 %v921, %v979
        %981 = vmatmul.f32.gmra.mxu0 %v714
        %v982 = vpop.f32.mrf.mxu0
        %v983 = vadd.f32 %v921, %v982
        %984 = vmatmul.f32.gmra.mxu0 %v717
        %v985 = vpop.f32.mrf.mxu0
        %v986 = vadd.f32 %v921, %v985
        %987 = vmatmul.f32.gmra.mxu0 %v720
        %v988 = vpop.f32.mrf.mxu0
        %v989 = vadd.f32 %v921, %v988
        %990 = vmatmul.f32.gmra.mxu0 %v723
        %v991 = vpop.f32.mrf.mxu0
        %v992 = vadd.f32 %v921, %v991
        %993 = vmatmul.f32.gmra.mxu0 %v726
        %v994 = vpop.f32.mrf.mxu0
        %v995 = vadd.f32 %v921, %v994
        %996 = vmatmul.f32.gmra.mxu0 %v729
        %v997 = vpop.f32.mrf.mxu0
        %v998 = vadd.f32 %v921, %v997
        %999 = vmatmul.f32.gmra.mxu0 %v732
        %v1000 = vpop.f32.mrf.mxu0
        %v1001 = vadd.f32 %v921, %v1000
        %1002 = vmatmul.f32.gmra.mxu0 %v735
        %v1003 = vpop.f32.mrf.mxu0
        %v1004 = vadd.f32 %v921, %v1003
        %1005 = vmatmul.f32.gmra.mxu0 %v738
        %v1006 = vpop.f32.mrf.mxu0
        %v1007 = vadd.f32 %v921, %v1006
        %1008 = vmatmul.f32.gmra.mxu0 %v741
        %v1009 = vpop.f32.mrf.mxu0
        %v1010 = vadd.f32 %v921, %v1009
        %1011 = vmatmul.f32.gmra.mxu0 %v744
        %v1012 = vpop.f32.mrf.mxu0
        %v1013 = vadd.f32 %v921, %v1012
        %1014 = vmatmul.f32.gmra.mxu0 %v747
        %v1015 = vpop.f32.mrf.mxu0
        %v1016 = vadd.f32 %v921, %v1015
        %1017 = vmatmul.f32.gmra.mxu0 %v750
        %v1018 = vpop.f32.mrf.mxu0
        %v1019 = vadd.f32 %v921, %v1018
        %1020 = vmatmul.f32.gmra.mxu0 %v753
        %v1021 = vpop.f32.mrf.mxu0
        %v1022 = vadd.f32 %v921, %v1021
        %1023 = vmatmul.f32.gmra.mxu0 %v756
        %v1024 = vpop.f32.mrf.mxu0
        %v1025 = vadd.f32 %v921, %v1024
        %1026 = vmatmul.f32.gmra.mxu0 %v759
        %v1027 = vpop.f32.mrf.mxu0
        %v1028 = vadd.f32 %v921, %v1027
        %1029 = vmatmul.f32.gmra.mxu0 %v762
        %v1030 = vpop.f32.mrf.mxu0
        %v1031 = vadd.f32 %v921, %v1030
        %1032 = vmatmul.f32.gmra.mxu0 %v765
        %v1033 = vpop.f32.mrf.mxu0
        %v1034 = vadd.f32 %v921, %v1033
        %1035 = vmatmul.f32.gmra.mxu0 %v768
        %v1036 = vpop.f32.mrf.mxu0
        %v1037 = vadd.f32 %v921, %v1036
        %1038 = vdwg.mxu0
        %1039 = vst.msk [vmem:[%s445] sm:$0xff] %vm546, %v944
        %1040 = vst.msk [vmem:[%s445 + $0x8] sm:$0xff] %vm546, %v947
        %1041 = vst.msk [vmem:[%s445 + $0x10] sm:$0xff] %vm546, %v950
        %1042 = vst.msk [vmem:[%s445 + $0x18] sm:$0xff] %vm546, %v953
        %1043 = vst.msk [vmem:[%s445 + $0x20] sm:$0xff] %vm546, %v956
        %1044 = vst.msk [vmem:[%s445 + $0x28] sm:$0xff] %vm546, %v959
        %1045 = vst.msk [vmem:[%s445 + $0x30] sm:$0xff] %vm546, %v962
        %1046 = vst.msk [vmem:[%s445 + $0x38] sm:$0xff] %vm546, %v965
        %1047 = vst.msk [vmem:[%s445 + $0x40] sm:$0xff] %vm546, %v968
        %1048 = vst.msk [vmem:[%s445 + $0x48] sm:$0xff] %vm546, %v971
        %1049 = vst.msk [vmem:[%s445 + $0x50] sm:$0xff] %vm546, %v974
        %1050 = vst.msk [vmem:[%s445 + $0x58] sm:$0xff] %vm546, %v977
        %1051 = vst.msk [vmem:[%s445 + $0x60] sm:$0xff] %vm546, %v980
        %1052 = vst.msk [vmem:[%s445 + $0x68] sm:$0xff] %vm546, %v983
        %1053 = vst.msk [vmem:[%s445 + $0x70] sm:$0xff] %vm546, %v986
        %1054 = vst.msk [vmem:[%s445 + $0x78] sm:$0xff] %vm546, %v989
        %1055 = vst.msk [vmem:[%s445 + $0x80] sm:$0xff] %vm546, %v992
        %1056 = vst.msk [vmem:[%s445 + $0x88] sm:$0xff] %vm546, %v995
        %1057 = vst.msk [vmem:[%s445 + $0x90] sm:$0xff] %vm546, %v998
        %1058 = vst.msk [vmem:[%s445 + $0x98] sm:$0xff] %vm546, %v1001
        %1059 = vst.msk [vmem:[%s445 + $0xa0] sm:$0xff] %vm546, %v1004
        %1060 = vst.msk [vmem:[%s445 + $0xa8] sm:$0xff] %vm546, %v1007
        %1061 = vst.msk [vmem:[%s445 + $0xb0] sm:$0xff] %vm546, %v1010
        %1062 = vst.msk [vmem:[%s445 + $0xb8] sm:$0xff] %vm546, %v1013
        %1063 = vst.msk [vmem:[%s445 + $0xc0] sm:$0xff] %vm546, %v1016
        %1064 = vst.msk [vmem:[%s445 + $0xc8] sm:$0xff] %vm546, %v1019
        %1065 = vst.msk [vmem:[%s445 + $0xd0] sm:$0xff] %vm546, %v1022
        %1066 = vst.msk [vmem:[%s445 + $0xd8] sm:$0xff] %vm546, %v1025
        %1067 = vst.msk [vmem:[%s445 + $0xe0] sm:$0xff] %vm546, %v1028
        %1068 = vst.msk [vmem:[%s445 + $0xe8] sm:$0xff] %vm546, %v1031
        %1069 = vst.msk [vmem:[%s445 + $0xf0] sm:$0xff] %vm546, %v1034
        %1070 = vst.msk [vmem:[%s445 + $0xf8] sm:$0xff] %vm546, %v1037
        %s1071 = smul.u32 32, %s33
        %p1072 = scmp.lt.s32.totalorder %s32, 1
        %s1073 = scalar_select %p1072, %s32, 1
        %p1074 = scmp.lt.s32.totalorder %s1071, 31
        %s1075 = scalar_select %p1074, %s1071, 31
        %s1076 = smul.addr %s1073, 32
        %s1077 = sadd.s32 %s1075, %s1076
        %s1078 = smul.addr %s1077, 8
        %s1079 = scalar_lea.vmem %s7, %s1078
        %s1080 = sand.u32 %s232, 1
        %s1081 = scalar_lea.sflag [#allocation4], %s1080
        %s1082 = sand.u32 %s232, 1
        %s1083 = smul.addr %s1082, 8
        %s1084 = scalar_lea.vmem [#allocation8], %s1083
        %s1085 = smul.u32 32, %s33
        %p1086 = scmp.lt.s32.totalorder %s32, 1
        %s1087 = scalar_select %p1086, %s32, 1
        %p1088 = scmp.lt.s32.totalorder %s1085, 31
        %s1089 = scalar_select %p1088, %s1085, 31
        %s1090 = smul.addr %s1087, 32
        %s1091 = sadd.s32 %s1089, %s1090
        %s1092 = smul.addr %s1091, 8
        %s1093 = scalar_lea.vmem %s9, %s1092
        // Predicated region
        $region61: #{tpu_custom_call.1} parent=47 // pred_check
          %p1094 = pneg %p214
        $region62: #{tpu_custom_call.1} parent=47 // pred_check_branch
          %1096 = sbr.rel (%p1094) target = $region64
        $region63: #{tpu_custom_call.1} parent=47 // pred_region
          %s1097 = smul.u32 32, %s33
        $region64: #{tpu_custom_call.1} parent=47 // pred_fallthru
          _
        // Predicated region
        $region65: #{tpu_custom_call.1} parent=47 // pred_check
          %p1098 = pneg %p242
        $region66: #{tpu_custom_call.1} parent=47 // pred_check_branch
          %1100 = sbr.rel (%p1098) target = $region68
        $region67: #{tpu_custom_call.1} parent=47 // pred_region
          %s1101 = smul.u32 2, %s33
          %1103 = vsyncadd %s1081, 0
          %s1104 = smul.addr %s32, 2
          %s1105 = sadd.s32 %s1101, %s1104
          %s1106 = smul.addr %s1105, 4
          %s1107 = scalar_lea.hbm %s8, %s1106
          %s1109 = sshll.u32 %s1084, 4
          %s1110 = int_to_ptr.vmem [resolvable:$true] %s1109
          %s1111 = sshll.u32 %s1107, 4
          %s1112 = int_to_ptr.hbm [resolvable:$true] %s1111
          %1114 = dma.vmem_to_hbm [thread:$0]  %s1110, 128, %s1112, %s1081
        $region68: #{tpu_custom_call.1} parent=47 // pred_fallthru
          _
        // Predicated region
        $region69: #{tpu_custom_call.1} parent=47 // pred_check
          %p1115 = pneg %p270
        $region70: #{tpu_custom_call.1} parent=47 // pred_check_branch
          %1117 = sbr.rel (%p1115) target = $region72
        $region71: #{tpu_custom_call.1} parent=47 // pred_region
          %s1118 = smul.u32 32, %s33
        $region72: #{tpu_custom_call.1} parent=47 // pred_fallthru
          _
      $region48: #{tpu_custom_call.1} parent=5 // pred_fallthru
        _
      %p1119 = scmp.le.s32.totalorder 2, %s23
      // Predicated region
      $region73: #{tpu_custom_call.1} parent=5 // pred_check
        %p1120 = pneg %p1119
      $region74: #{tpu_custom_call.1} parent=5 // pred_check_branch
        %1122 = sbr.rel (%p1120) target = $region76
      $region75: #{tpu_custom_call.1} parent=5 // pred_region
        %s1123 = ssub.s32 %s23, 2
        // Predicated region
        $region77: #{tpu_custom_call.1} parent=75 // pred_check
          %p1124 = pneg %p220
        $region78: #{tpu_custom_call.1} parent=75 // pred_check_branch
          %1126 = sbr.rel (%p1124) target = $region80
        $region79: #{tpu_custom_call.1} parent=75 // pred_region
          %s1127 = smul.u32 32, %s35
          %p1128 = scmp.lt.s32.totalorder %s34, 1
          %s1129 = scalar_select %p1128, %s34, 1
          %p1130 = scmp.lt.s32.totalorder %s1127, 31
          %s1131 = scalar_select %p1130, %s1127, 31
          %s1132 = smul.addr %s1129, 32
          %s1133 = sadd.s32 %s1131, %s1132
          %s1134 = smul.addr %s1133, 8
          %s1135 = scalar_lea.vmem %s7, %s1134
        $region80: #{tpu_custom_call.1} parent=75 // pred_fallthru
          _
        // Predicated region
        $region81: #{tpu_custom_call.1} parent=75 // pred_check
          %p1136 = pneg %p248
        $region82: #{tpu_custom_call.1} parent=75 // pred_check_branch
          %1138 = sbr.rel (%p1136) target = $region84
        $region83: #{tpu_custom_call.1} parent=75 // pred_region
          %s1139 = sand.u32 %s233, 1
          %s1140 = scalar_lea.sflag [#allocation4], %s1139
          %s1141 = sand.u32 %s233, 1
          %s1142 = smul.addr %s1141, 8
          %s1143 = scalar_lea.vmem [#allocation8], %s1142
          %1145 = dma.done %s1140, 128
        $region84: #{tpu_custom_call.1} parent=75 // pred_fallthru
          _
        // Predicated region
        $region85: #{tpu_custom_call.1} parent=75 // pred_check
          %p1146 = pneg %p276
        $region86: #{tpu_custom_call.1} parent=75 // pred_check_branch
          %1148 = sbr.rel (%p1146) target = $region88
        $region87: #{tpu_custom_call.1} parent=75 // pred_region
          %s1149 = smul.u32 32, %s35
          %p1150 = scmp.lt.s32.totalorder %s34, 1
          %s1151 = scalar_select %p1150, %s34, 1
          %p1152 = scmp.lt.s32.totalorder %s1149, 31
          %s1153 = scalar_select %p1152, %s1149, 31
          %s1154 = smul.addr %s1151, 32
          %s1155 = sadd.s32 %s1153, %s1154
          %s1156 = smul.addr %s1155, 8
          %s1157 = scalar_lea.vmem %s9, %s1156
        $region88: #{tpu_custom_call.1} parent=75 // pred_fallthru
          _
      $region76: #{tpu_custom_call.1} parent=5 // pred_fallthru
        _
    $region6: #{tpu_custom_call.1} parent=1 // loop_footer
      %s27 = sadd.s32 1, %s23
    $region7: #{tpu_custom_call.1} parent=1 // loop_footer_branch
      %22 = sbr.rel target = $region3
    $region8: #{tpu_custom_call.1} parent=1 // loop_exit
      _
    %1158 = vsyncpa [#allocation3], 1
    %s1159 = scalar_lea.sflag [#allocation3], 1
    %1160 = vsyncpa %s1159, 1
    %1161 = vsyncpa [#allocation6], 1
    %1162 = vsyncpa [#allocation4], 1
    %s1163 = scalar_lea.sflag [#allocation4], 1
    %1164 = vsyncpa %s1163, 1

</llo_original>
